<compile_context>
chip_gen: v7x
topology: tpu7x:2x2x1
jax: 0.10.0
libtpu: 0.0.40
codegen_flags: <defaults>
</compile_context>

<pallas_src>
import jax
import jax.numpy as jnp
from jax import lax
from jax.experimental import pallas as pl
from jax.experimental.pallas import tpu as pltpu


def _round_up(x: int, m: int) -> int:
    return ((x + m - 1) // m) * m


def _make_gather_kernel(tb: int, unroll: int, idx_is_blocked: bool):
    """Row-gather kernel: DMA `tb` table rows straight into the output block.

    idx_ref   : SMEM int32 — this block's token ids (blocked mode) or the whole
                flattened id array (scalar-prefetch mode).
    table_ref : (V, D) embedding table — VMEM-resident (fast path) or HBM.
    out_ref   : (tb, D) VMEM output block — the DMA destination.
    sem       : shared DMA semaphore.
    """

    def kernel(idx_ref, table_ref, out_ref, sem):
        base = 0 if idx_is_blocked else pl.program_id(0) * tb

        # Issue all row copies; manual x`unroll` unrolling lets the SMEM index
        # load of row t+1 overlap the descriptor issue of row t.
        def issue_chunk(c, carry):
            for u in range(unroll):
                t = c * unroll + u
                tok = idx_ref[base + t]
                pltpu.make_async_copy(
                    table_ref.at[pl.ds(tok, 1), :],
                    out_ref.at[pl.ds(t, 1), :],
                    sem,
                ).start()
            return carry

        lax.fori_loop(0, tb // unroll, issue_chunk, 0)

        # Drain: one wait per row copy, each with the same (1, D) transfer size
        # as the copies above, so semaphore bookkeeping matches no matter how
        # DMA-semaphore accounting is defined.  (An aggregated single wait
        # would rely on byte-count accounting.)  Unrolled to cut scalar-path
        # serialization between waits.
        def drain_chunk(c, carry):
            for _ in range(unroll):
                pltpu.make_async_copy(
                    table_ref.at[pl.ds(0, 1), :],
                    out_ref.at[pl.ds(0, 1), :],
                    sem,
                ).wait()
            return carry

        lax.fori_loop(0, tb // unroll, drain_chunk, 0)

    return kernel


def embedding_forward(
    input_x: jax.Array,
    table: jax.Array,
    *,
    tb: int = 512,
    unroll: int = 8,
    vmem_table_budget=None,
    prefetch_token_limit: int = 4096,
):
    """Equivalent of EmbeddingLayer.forward: table[input_x]."""
    vocab, dim = table.shape
    orig_shape = input_x.shape
    itemsize = jnp.dtype(table.dtype).itemsize

    # TODO(synk): torch.nn.Embedding raises on out-of-range indices; here we
    # clamp so an OOB index cannot fault the gather DMA.
    idx_flat = jnp.clip(input_x.reshape(-1).astype(jnp.int32), 0, vocab - 1)
    n = idx_flat.shape[0]

    # Packed sublane tile for this dtype: 8 rows (32-bit) / 16 (bf16) / 32 (int8).
    row_align = max(8, 32 // itemsize)

    # Token block: big enough to amortize per-grid-step overhead, clamped for
    # tiny inputs, rounded to the packed tile.
    tb = max(row_align, min(tb, _round_up(n, row_align)))
    tb = _round_up(tb, row_align)
    unroll = max(1, min(unroll, tb))
    while tb % unroll:
        unroll //= 2

    n_pad = _round_up(n, tb)
    if n_pad != n:
        idx_flat = jnp.pad(idx_flat, (0, n_pad - n))  # pads with id 0 (valid row)
    grid = (n_pad // tb,)

    # ---- fast-path gate: keep the table resident in VMEM when it fits a
    # generation-aware budget (v7x: 64 MiB physical; v5e/v6e: 128 MiB).
    table_bytes = vocab * dim * itemsize
    if vmem_table_budget is None:
        try:
            vmem_cap = pltpu.get_tpu_info().vmem_capacity_bytes
        except Exception:
            vmem_cap = 64 * 1024 * 1024  # conservative (v7x-sized) fallback
        vmem_table_budget = min(vmem_cap // 3, 48 * 1024 * 1024)
    use_resident_table = table_bytes <= vmem_table_budget

    # ---- index delivery: whole-array scalar prefetch only for small inputs;
    # large batch*seq uses a pipelined per-block (tb,) SMEM tile so SMEM usage
    # stays bounded at compile time.
    use_scalar_prefetch = n_pad <= prefetch_token_limit

    kernel = _make_gather_kernel(tb, unroll, idx_is_blocked=not use_scalar_prefetch)

    if use_scalar_prefetch:
        num_scalar_prefetch = 1
        table_spec = (
            pl.BlockSpec((vocab, dim), lambda i, idx: (0, 0))  # resident, fetched once
            if use_resident_table
            else pl.BlockSpec(memory_space=pl.ANY)             # stays in HBM
        )
        in_specs = [table_spec]
        out_spec = pl.BlockSpec((tb, dim), lambda i, idx: (i, 0))
    else:
        num_scalar_prefetch = 0
        idx_spec = pl.BlockSpec(
            (tb,), lambda i: (i,), memory_space=pltpu.MemorySpace.SMEM
        )
        table_spec = (
            pl.BlockSpec((vocab, dim), lambda i: (0, 0))
            if use_resident_table
            else pl.BlockSpec(memory_space=pl.ANY)
        )
        in_specs = [idx_spec, table_spec]
        out_spec = pl.BlockSpec((tb, dim), lambda i: (i, 0))

    grid_spec = pltpu.PrefetchScalarGridSpec(
        num_scalar_prefetch=num_scalar_prefetch,
        grid=grid,
        in_specs=in_specs,
        out_specs=out_spec,
        scratch_shapes=[pltpu.SemaphoreType.DMA(())],
    )

    # Raise the scoped-VMEM limit only when the resident table actually needs it.
    out_block_bytes = tb * dim * itemsize
    if use_resident_table:
        vmem_needed = 2 * table_bytes + 4 * out_block_bytes + (2 << 20)
    else:
        vmem_needed = 8 * out_block_bytes + (2 << 20)
    vmem_limit_bytes = int(vmem_needed) if vmem_needed > (16 << 20) else None

    out_flat = pl.pallas_call(
        kernel,
        out_shape=jax.ShapeDtypeStruct((n_pad, dim), table.dtype),
        grid_spec=grid_spec,
        compiler_params=pltpu.CompilerParams(
            dimension_semantics=("parallel",),  # independent output blocks
            vmem_limit_bytes=vmem_limit_bytes,
        ),
        # Pure memory op: lets XLA overlap surrounding HLO with this call.
        cost_estimate=pl.CostEstimate(
            flops=0,
            transcendentals=0,
            bytes_accessed=int(2 * n_pad * dim * itemsize + n_pad * 4),
        ),
    )(idx_flat, table)

    # TODO(synk): bf16/int8 tables could pack two rows per copy (pltpu.bitcast
    # to u32) to keep per-DMA transfer size up on the HBM path.
    return out_flat[:n].reshape(*orig_shape, dim)


if __name__ == "__main__":
    # Module config (synthetic, deterministic init — mirrors xavier_normal_).
    word_num = 256        # vocab size V
    embedding_dim = 128   # D
    batch, seq = 2, 8

    key = jax.random.PRNGKey(0)
    k_w, k_idx = jax.random.split(key)

    # xavier_normal_: std = sqrt(2 / (fan_in + fan_out))
    std = (2.0 / (word_num + embedding_dim)) ** 0.5
    table = jax.random.normal(k_w, (word_num, embedding_dim), jnp.float32) * std

    input_x = jax.random.randint(k_idx, (batch, seq), 0, word_num, jnp.int32)

    out = embedding_forward(input_x, table)
    out = jax.block_until_ready(out)

    # Reference check against plain JAX gather (should be an exact copy).
    ref = table[input_x]
    assert out.shape == (batch, seq, embedding_dim)
    assert jnp.allclose(out, ref, atol=1e-6), "mismatch vs reference gather"

    print("KERNEL_OK")
</pallas_src>

<mosaic_0001>
module attributes {stable_mosaic.version = 11 : i64} {
  func.func @kernel(%arg0: i32, %arg1: memref<16xi32, #tpu.memory_space<smem>>, %arg2: memref<256x128xf32, #tpu.memory_space<vmem>>, %arg3: memref<16x128xf32, #tpu.memory_space<vmem>>, %arg4: memref<!tpu.dma_semaphore, #tpu.memory_space<semaphore_mem>>) attributes {dimension_semantics = [#tpu.dimension_semantics<parallel>], iteration_bounds = array<i64: 1>, scalar_prefetch = 1 : i64, scratch_operands = 1 : i64, tpu.core_type = #tpu.core_type<tc>, window_params = [{pipeline_mode = #tpu.pipeline_mode<synchronous>, transform_indices = @transform_0, window_bounds = array<i64: 256, 128>}, {transform_indices = @transform_1, window_bounds = array<i64: 16, 128>}]} {
    %c16_i32 = arith.constant 16 : i32
    %0 = arith.muli %arg0, %c16_i32 : i32
    %c0_i32 = arith.constant 0 : i32
    %c2_i32 = arith.constant 2 : i32
    %1 = arith.addi %c0_i32, %c2_i32 : i32
    %c1_i32 = arith.constant 1 : i32
    scf.for %arg5 = %c0_i32 to %1 step %c1_i32  : i32 {
      %c8_i32 = arith.constant 8 : i32
      %3 = arith.muli %arg5, %c8_i32 : i32
      %c0_i32_4 = arith.constant 0 : i32
      %4 = arith.addi %3, %c0_i32_4 : i32
      %5 = arith.addi %0, %4 : i32
      %6 = arith.index_cast %5 : i32 to index
      %7 = memref.load %arg1[%6] : memref<16xi32, #tpu.memory_space<smem>>
      %c0_i32_5 = arith.constant 0 : i32
      %8 = tpu.memref_slice %arg2[%7, %c0_i32_5] : memref<256x128xf32, #tpu.memory_space<vmem>> -> memref<1x128xf32, #tpu.memory_space<vmem>>
      %c0_i32_6 = arith.constant 0 : i32
      %9 = tpu.memref_slice %arg3[%4, %c0_i32_6] : memref<16x128xf32, #tpu.memory_space<vmem>> -> memref<1x128xf32, #tpu.memory_space<vmem>>
      tpu.enqueue_dma source(%8 : memref<1x128xf32, #tpu.memory_space<vmem>>) target(%9 : memref<1x128xf32, #tpu.memory_space<vmem>>) target_semaphore(%arg4 : memref<!tpu.dma_semaphore, #tpu.memory_space<semaphore_mem>>)
      %c8_i32_7 = arith.constant 8 : i32
      %10 = arith.muli %arg5, %c8_i32_7 : i32
      %c1_i32_8 = arith.constant 1 : i32
      %11 = arith.addi %10, %c1_i32_8 : i32
      %12 = arith.addi %0, %11 : i32
      %13 = arith.index_cast %12 : i32 to index
      %14 = memref.load %arg1[%13] : memref<16xi32, #tpu.memory_space<smem>>
      %c0_i32_9 = arith.constant 0 : i32
      %15 = tpu.memref_slice %arg2[%14, %c0_i32_9] : memref<256x128xf32, #tpu.memory_space<vmem>> -> memref<1x128xf32, #tpu.memory_space<vmem>>
      %c0_i32_10 = arith.constant 0 : i32
      %16 = tpu.memref_slice %arg3[%11, %c0_i32_10] : memref<16x128xf32, #tpu.memory_space<vmem>> -> memref<1x128xf32, #tpu.memory_space<vmem>>
      tpu.enqueue_dma source(%15 : memref<1x128xf32, #tpu.memory_space<vmem>>) target(%16 : memref<1x128xf32, #tpu.memory_space<vmem>>) target_semaphore(%arg4 : memref<!tpu.dma_semaphore, #tpu.memory_space<semaphore_mem>>)
      %c8_i32_11 = arith.constant 8 : i32
      %17 = arith.muli %arg5, %c8_i32_11 : i32
      %c2_i32_12 = arith.constant 2 : i32
      %18 = arith.addi %17, %c2_i32_12 : i32
      %19 = arith.addi %0, %18 : i32
      %20 = arith.index_cast %19 : i32 to index
      %21 = memref.load %arg1[%20] : memref<16xi32, #tpu.memory_space<smem>>
      %c0_i32_13 = arith.constant 0 : i32
      %22 = tpu.memref_slice %arg2[%21, %c0_i32_13] : memref<256x128xf32, #tpu.memory_space<vmem>> -> memref<1x128xf32, #tpu.memory_space<vmem>>
      %c0_i32_14 = arith.constant 0 : i32
      %23 = tpu.memref_slice %arg3[%18, %c0_i32_14] : memref<16x128xf32, #tpu.memory_space<vmem>> -> memref<1x128xf32, #tpu.memory_space<vmem>>
      tpu.enqueue_dma source(%22 : memref<1x128xf32, #tpu.memory_space<vmem>>) target(%23 : memref<1x128xf32, #tpu.memory_space<vmem>>) target_semaphore(%arg4 : memref<!tpu.dma_semaphore, #tpu.memory_space<semaphore_mem>>)
      %c8_i32_15 = arith.constant 8 : i32
      %24 = arith.muli %arg5, %c8_i32_15 : i32
      %c3_i32 = arith.constant 3 : i32
      %25 = arith.addi %24, %c3_i32 : i32
      %26 = arith.addi %0, %25 : i32
      %27 = arith.index_cast %26 : i32 to index
      %28 = memref.load %arg1[%27] : memref<16xi32, #tpu.memory_space<smem>>
      %c0_i32_16 = arith.constant 0 : i32
      %29 = tpu.memref_slice %arg2[%28, %c0_i32_16] : memref<256x128xf32, #tpu.memory_space<vmem>> -> memref<1x128xf32, #tpu.memory_space<vmem>>
      %c0_i32_17 = arith.constant 0 : i32
      %30 = tpu.memref_slice %arg3[%25, %c0_i32_17] : memref<16x128xf32, #tpu.memory_space<vmem>> -> memref<1x128xf32, #tpu.memory_space<vmem>>
      tpu.enqueue_dma source(%29 : memref<1x128xf32, #tpu.memory_space<vmem>>) target(%30 : memref<1x128xf32, #tpu.memory_space<vmem>>) target_semaphore(%arg4 : memref<!tpu.dma_semaphore, #tpu.memory_space<semaphore_mem>>)
      %c8_i32_18 = arith.constant 8 : i32
      %31 = arith.muli %arg5, %c8_i32_18 : i32
      %c4_i32 = arith.constant 4 : i32
      %32 = arith.addi %31, %c4_i32 : i32
      %33 = arith.addi %0, %32 : i32
      %34 = arith.index_cast %33 : i32 to index
      %35 = memref.load %arg1[%34] : memref<16xi32, #tpu.memory_space<smem>>
      %c0_i32_19 = arith.constant 0 : i32
      %36 = tpu.memref_slice %arg2[%35, %c0_i32_19] : memref<256x128xf32, #tpu.memory_space<vmem>> -> memref<1x128xf32, #tpu.memory_space<vmem>>
      %c0_i32_20 = arith.constant 0 : i32
      %37 = tpu.memref_slice %arg3[%32, %c0_i32_20] : memref<16x128xf32, #tpu.memory_space<vmem>> -> memref<1x128xf32, #tpu.memory_space<vmem>>
      tpu.enqueue_dma source(%36 : memref<1x128xf32, #tpu.memory_space<vmem>>) target(%37 : memref<1x128xf32, #tpu.memory_space<vmem>>) target_semaphore(%arg4 : memref<!tpu.dma_semaphore, #tpu.memory_space<semaphore_mem>>)
      %c8_i32_21 = arith.constant 8 : i32
      %38 = arith.muli %arg5, %c8_i32_21 : i32
      %c5_i32 = arith.constant 5 : i32
      %39 = arith.addi %38, %c5_i32 : i32
      %40 = arith.addi %0, %39 : i32
      %41 = arith.index_cast %40 : i32 to index
      %42 = memref.load %arg1[%41] : memref<16xi32, #tpu.memory_space<smem>>
      %c0_i32_22 = arith.constant 0 : i32
      %43 = tpu.memref_slice %arg2[%42, %c0_i32_22] : memref<256x128xf32, #tpu.memory_space<vmem>> -> memref<1x128xf32, #tpu.memory_space<vmem>>
      %c0_i32_23 = arith.constant 0 : i32
      %44 = tpu.memref_slice %arg3[%39, %c0_i32_23] : memref<16x128xf32, #tpu.memory_space<vmem>> -> memref<1x128xf32, #tpu.memory_space<vmem>>
      tpu.enqueue_dma source(%43 : memref<1x128xf32, #tpu.memory_space<vmem>>) target(%44 : memref<1x128xf32, #tpu.memory_space<vmem>>) target_semaphore(%arg4 : memref<!tpu.dma_semaphore, #tpu.memory_space<semaphore_mem>>)
      %c8_i32_24 = arith.constant 8 : i32
      %45 = arith.muli %arg5, %c8_i32_24 : i32
      %c6_i32 = arith.constant 6 : i32
      %46 = arith.addi %45, %c6_i32 : i32
      %47 = arith.addi %0, %46 : i32
      %48 = arith.index_cast %47 : i32 to index
      %49 = memref.load %arg1[%48] : memref<16xi32, #tpu.memory_space<smem>>
      %c0_i32_25 = arith.constant 0 : i32
      %50 = tpu.memref_slice %arg2[%49, %c0_i32_25] : memref<256x128xf32, #tpu.memory_space<vmem>> -> memref<1x128xf32, #tpu.memory_space<vmem>>
      %c0_i32_26 = arith.constant 0 : i32
      %51 = tpu.memref_slice %arg3[%46, %c0_i32_26] : memref<16x128xf32, #tpu.memory_space<vmem>> -> memref<1x128xf32, #tpu.memory_space<vmem>>
      tpu.enqueue_dma source(%50 : memref<1x128xf32, #tpu.memory_space<vmem>>) target(%51 : memref<1x128xf32, #tpu.memory_space<vmem>>) target_semaphore(%arg4 : memref<!tpu.dma_semaphore, #tpu.memory_space<semaphore_mem>>)
      %c8_i32_27 = arith.constant 8 : i32
      %52 = arith.muli %arg5, %c8_i32_27 : i32
      %c7_i32 = arith.constant 7 : i32
      %53 = arith.addi %52, %c7_i32 : i32
      %54 = arith.addi %0, %53 : i32
      %55 = arith.index_cast %54 : i32 to index
      %56 = memref.load %arg1[%55] : memref<16xi32, #tpu.memory_space<smem>>
      %c0_i32_28 = arith.constant 0 : i32
      %57 = tpu.memref_slice %arg2[%56, %c0_i32_28] : memref<256x128xf32, #tpu.memory_space<vmem>> -> memref<1x128xf32, #tpu.memory_space<vmem>>
      %c0_i32_29 = arith.constant 0 : i32
      %58 = tpu.memref_slice %arg3[%53, %c0_i32_29] : memref<16x128xf32, #tpu.memory_space<vmem>> -> memref<1x128xf32, #tpu.memory_space<vmem>>
      tpu.enqueue_dma source(%57 : memref<1x128xf32, #tpu.memory_space<vmem>>) target(%58 : memref<1x128xf32, #tpu.memory_space<vmem>>) target_semaphore(%arg4 : memref<!tpu.dma_semaphore, #tpu.memory_space<semaphore_mem>>)
    }
    %c2_i32_0 = arith.constant 2 : i32
    %c0_i32_1 = arith.constant 0 : i32
    %c2_i32_2 = arith.constant 2 : i32
    %2 = arith.addi %c0_i32_1, %c2_i32_2 : i32
    %c1_i32_3 = arith.constant 1 : i32
    scf.for %arg5 = %c0_i32_1 to %2 step %c1_i32_3  : i32 {
      %c0_i32_4 = arith.constant 0 : i32
      %c0_i32_5 = arith.constant 0 : i32
      %3 = tpu.memref_slice %arg2[%c0_i32_4, %c0_i32_5] : memref<256x128xf32, #tpu.memory_space<vmem>> -> memref<1x128xf32, #tpu.memory_space<vmem>>
      %c0_i32_6 = arith.constant 0 : i32
      %c0_i32_7 = arith.constant 0 : i32
      %4 = tpu.memref_slice %arg3[%c0_i32_6, %c0_i32_7] : memref<16x128xf32, #tpu.memory_space<vmem>> -> memref<1x128xf32, #tpu.memory_space<vmem>>
      tpu.wait_dma2 semaphore(%arg4 : memref<!tpu.dma_semaphore, #tpu.memory_space<semaphore_mem>>) src(%3 : memref<1x128xf32, #tpu.memory_space<vmem>>) dst(%4 : memref<1x128xf32, #tpu.memory_space<vmem>>)
      %c0_i32_8 = arith.constant 0 : i32
      %c0_i32_9 = arith.constant 0 : i32
      %5 = tpu.memref_slice %arg2[%c0_i32_8, %c0_i32_9] : memref<256x128xf32, #tpu.memory_space<vmem>> -> memref<1x128xf32, #tpu.memory_space<vmem>>
      %c0_i32_10 = arith.constant 0 : i32
      %c0_i32_11 = arith.constant 0 : i32
      %6 = tpu.memref_slice %arg3[%c0_i32_10, %c0_i32_11] : memref<16x128xf32, #tpu.memory_space<vmem>> -> memref<1x128xf32, #tpu.memory_space<vmem>>
      tpu.wait_dma2 semaphore(%arg4 : memref<!tpu.dma_semaphore, #tpu.memory_space<semaphore_mem>>) src(%5 : memref<1x128xf32, #tpu.memory_space<vmem>>) dst(%6 : memref<1x128xf32, #tpu.memory_space<vmem>>)
      %c0_i32_12 = arith.constant 0 : i32
      %c0_i32_13 = arith.constant 0 : i32
      %7 = tpu.memref_slice %arg2[%c0_i32_12, %c0_i32_13] : memref<256x128xf32, #tpu.memory_space<vmem>> -> memref<1x128xf32, #tpu.memory_space<vmem>>
      %c0_i32_14 = arith.constant 0 : i32
      %c0_i32_15 = arith.constant 0 : i32
      %8 = tpu.memref_slice %arg3[%c0_i32_14, %c0_i32_15] : memref<16x128xf32, #tpu.memory_space<vmem>> -> memref<1x128xf32, #tpu.memory_space<vmem>>
      tpu.wait_dma2 semaphore(%arg4 : memref<!tpu.dma_semaphore, #tpu.memory_space<semaphore_mem>>) src(%7 : memref<1x128xf32, #tpu.memory_space<vmem>>) dst(%8 : memref<1x128xf32, #tpu.memory_space<vmem>>)
      %c0_i32_16 = arith.constant 0 : i32
      %c0_i32_17 = arith.constant 0 : i32
      %9 = tpu.memref_slice %arg2[%c0_i32_16, %c0_i32_17] : memref<256x128xf32, #tpu.memory_space<vmem>> -> memref<1x128xf32, #tpu.memory_space<vmem>>
      %c0_i32_18 = arith.constant 0 : i32
      %c0_i32_19 = arith.constant 0 : i32
      %10 = tpu.memref_slice %arg3[%c0_i32_18, %c0_i32_19] : memref<16x128xf32, #tpu.memory_space<vmem>> -> memref<1x128xf32, #tpu.memory_space<vmem>>
      tpu.wait_dma2 semaphore(%arg4 : memref<!tpu.dma_semaphore, #tpu.memory_space<semaphore_mem>>) src(%9 : memref<1x128xf32, #tpu.memory_space<vmem>>) dst(%10 : memref<1x128xf32, #tpu.memory_space<vmem>>)
      %c0_i32_20 = arith.constant 0 : i32
      %c0_i32_21 = arith.constant 0 : i32
      %11 = tpu.memref_slice %arg2[%c0_i32_20, %c0_i32_21] : memref<256x128xf32, #tpu.memory_space<vmem>> -> memref<1x128xf32, #tpu.memory_space<vmem>>
      %c0_i32_22 = arith.constant 0 : i32
      %c0_i32_23 = arith.constant 0 : i32
      %12 = tpu.memref_slice %arg3[%c0_i32_22, %c0_i32_23] : memref<16x128xf32, #tpu.memory_space<vmem>> -> memref<1x128xf32, #tpu.memory_space<vmem>>
      tpu.wait_dma2 semaphore(%arg4 : memref<!tpu.dma_semaphore, #tpu.memory_space<semaphore_mem>>) src(%11 : memref<1x128xf32, #tpu.memory_space<vmem>>) dst(%12 : memref<1x128xf32, #tpu.memory_space<vmem>>)
      %c0_i32_24 = arith.constant 0 : i32
      %c0_i32_25 = arith.constant 0 : i32
      %13 = tpu.memref_slice %arg2[%c0_i32_24, %c0_i32_25] : memref<256x128xf32, #tpu.memory_space<vmem>> -> memref<1x128xf32, #tpu.memory_space<vmem>>
      %c0_i32_26 = arith.constant 0 : i32
      %c0_i32_27 = arith.constant 0 : i32
      %14 = tpu.memref_slice %arg3[%c0_i32_26, %c0_i32_27] : memref<16x128xf32, #tpu.memory_space<vmem>> -> memref<1x128xf32, #tpu.memory_space<vmem>>
      tpu.wait_dma2 semaphore(%arg4 : memref<!tpu.dma_semaphore, #tpu.memory_space<semaphore_mem>>) src(%13 : memref<1x128xf32, #tpu.memory_space<vmem>>) dst(%14 : memref<1x128xf32, #tpu.memory_space<vmem>>)
      %c0_i32_28 = arith.constant 0 : i32
      %c0_i32_29 = arith.constant 0 : i32
      %15 = tpu.memref_slice %arg2[%c0_i32_28, %c0_i32_29] : memref<256x128xf32, #tpu.memory_space<vmem>> -> memref<1x128xf32, #tpu.memory_space<vmem>>
      %c0_i32_30 = arith.constant 0 : i32
      %c0_i32_31 = arith.constant 0 : i32
      %16 = tpu.memref_slice %arg3[%c0_i32_30, %c0_i32_31] : memref<16x128xf32, #tpu.memory_space<vmem>> -> memref<1x128xf32, #tpu.memory_space<vmem>>
      tpu.wait_dma2 semaphore(%arg4 : memref<!tpu.dma_semaphore, #tpu.memory_space<semaphore_mem>>) src(%15 : memref<1x128xf32, #tpu.memory_space<vmem>>) dst(%16 : memref<1x128xf32, #tpu.memory_space<vmem>>)
      %c0_i32_32 = arith.constant 0 : i32
      %c0_i32_33 = arith.constant 0 : i32
      %17 = tpu.memref_slice %arg2[%c0_i32_32, %c0_i32_33] : memref<256x128xf32, #tpu.memory_space<vmem>> -> memref<1x128xf32, #tpu.memory_space<vmem>>
      %c0_i32_34 = arith.constant 0 : i32
      %c0_i32_35 = arith.constant 0 : i32
      %18 = tpu.memref_slice %arg3[%c0_i32_34, %c0_i32_35] : memref<16x128xf32, #tpu.memory_space<vmem>> -> memref<1x128xf32, #tpu.memory_space<vmem>>
      tpu.wait_dma2 semaphore(%arg4 : memref<!tpu.dma_semaphore, #tpu.memory_space<semaphore_mem>>) src(%17 : memref<1x128xf32, #tpu.memory_space<vmem>>) dst(%18 : memref<1x128xf32, #tpu.memory_space<vmem>>)
    }
    return
  }
  func.func @transform_0(%arg0: i32, %arg1: memref<16xi32, #tpu.memory_space<smem>>) -> (i32, i32) {
    %c0_i32 = arith.constant 0 : i32
    %c0_i32_0 = arith.constant 0 : i32
    %c0_i32_1 = arith.constant 0 : i32
    return %c0_i32, %c0_i32_0 : i32, i32
  }
  func.func @transform_1(%arg0: i32, %arg1: memref<16xi32, #tpu.memory_space<smem>>) -> (i32, i32) {
    %c0_i32 = arith.constant 0 : i32
    %c0_i32_0 = arith.constant 0 : i32
    return %arg0, %c0_i32 : i32, i32
  }
}

</mosaic_0001>

<llo_original>
// kernel: tpu_custom_call.1
$region0: #{tpu_custom_call.1}
  #allocation0 [shape = 'u32[]', space=smem, size = 0x4, offset = 0x4, fixed_abs, tag = 'smem constant byte address 0x4 - core index']
  #allocation1 [shape = 'u32[144,128]{1,0:T(1,128)}', space=vmem, size = 0x12000, scoped, tag = 'internal scratch']
  #allocation2 [shape = 's32[1]{0}', space=sflag, size = 0x4, scoped, tag = 'scratch operand']
  #allocation3 [shape = 's32[1]{0}', space=sflag, size = 0x4, scoped, tag = 'scoped memory for tpu_custom_call.1']
  #allocation4 [shape = 'u8[512]{0}', space=smem, size = 0x200, scoped, tag = 'prefetched SMEM operand 0']
  #allocation9 [shape = 's32[]', space=sflag, size = 0x4, offset = 0, fixed_abs, tag = 'sflag constant byte address 0x0 - dummy sync flag']
  #allocation10 [shape = 's32[]', space=sflag, size = 0x4, offset = 0, fixed_abs, tag = 'sflag constant byte address 0x0 - dummy sync flag']
  #allocation11 [shape = 's32[]', space=sflag, size = 0x4, offset = 0, fixed_abs, tag = 'sflag constant byte address 0x0 - dummy sync flag']
  #allocation12 [shape = 's32[]', space=sflag, size = 0x4, offset = 0, fixed_abs, tag = 'sflag constant byte address 0x0 - dummy sync flag']
  #allocation13 [shape = 's32[]', space=sflag, size = 0x4, offset = 0, fixed_abs, tag = 'sflag constant byte address 0x0 - dummy sync flag']
  #allocation14 [shape = 's32[]', space=sflag, size = 0x4, offset = 0, fixed_abs, tag = 'sflag constant byte address 0x0 - dummy sync flag']
  #allocation15 [shape = 's32[]', space=sflag, size = 0x4, offset = 0, fixed_abs, tag = 'sflag constant byte address 0x0 - dummy sync flag']
  #allocation16 [shape = 's32[]', space=sflag, size = 0x4, offset = 0, fixed_abs, tag = 'sflag constant byte address 0x0 - dummy sync flag']
  %s0 = inlined_call_operand.hbm [shape: s32[16], index: 0, kind: input, shape index: {}]
  %s1 = inlined_call_operand.hbm [shape: f32[256,128], index: 1, kind: input, shape index: {}]
  %s2 = inlined_call_operand.hbm [shape: f32[16,128], index: 2, kind: output, shape index: {}]
  %s3 = sld [smem:[#allocation0]]
  $region272: #{tpu_custom_call.1} parent=0
    _
  %s5 = ssub.s32 1, %s3
  %s6 = scalar_select 0, %s5, %s3
  %8 = dma.hbm_to_smem %s0, 16, [#allocation4], [#allocation3]
  %9 = dma.done [#allocation3], 16
  %10 = sfence
  $region1: #{tpu_custom_call.1} parent=0
    #allocation5 [shape = 'u8[131072]{0}', space=vmem, size = 0x20000, scoped, tag = 'input window, operand 1, single buffered']
    #allocation6 [shape = 's32[1]{0}', space=sflag, size = 0x4, scoped, tag = 'scoped memory for tpu_custom_call.1']
    #allocation7 [shape = 's32[1]{0}', space=sflag, size = 0x4, scoped, tag = 'scoped memory for tpu_custom_call.1']
    #allocation8 [shape = 'u8[8192]{0}', space=vmem, size = 0x2000, scoped, tag = 'output window, operand 0, single buffered']
    %11 = vsyncpa [#allocation6], 0
    %12 = vsyncpa [#allocation7], 0
    // Predicated region
    $region2: #{tpu_custom_call.1} parent=1 // pred_check
      _
    $region3: #{tpu_custom_call.1} parent=1 // pred_check_branch
      %14 = sbr.rel (0) target = $region5
    $region4: #{tpu_custom_call.1} parent=1 // pred_region
      %s16 = ssub.s32 4096, 4096
      %17 = vsyncadd [#allocation6], %s16
      %s18 = sshll.u32 [#allocation5], 4
      %s19 = int_to_ptr.vmem [resolvable:$true] %s18
      %24 = dma.hbm_to_vmem [thread:$0]  %s1, 4096, %s19, [#allocation6], 128, 128, 8
    $region5: #{tpu_custom_call.1} parent=1 // pred_fallthru
      _
    // Predicated region
    $region6: #{tpu_custom_call.1} parent=1 // pred_check
      _
    $region7: #{tpu_custom_call.1} parent=1 // pred_check_branch
      %26 = sbr.rel (0) target = $region9
    $region8: #{tpu_custom_call.1} parent=1 // pred_region
      %27 = dma.done [#allocation6], 4096
    $region9: #{tpu_custom_call.1} parent=1 // pred_fallthru
      _
    %s28 = smul.u32 0, 16
    loop: start=0, step=1, limit=2
    $region10: #{tpu_custom_call.1} parent=1 // loop_pre_header
      _
    $region11: #{tpu_custom_call.1} parent=1 // loop_header
      %s30 = sphi 0, %s34
      %p31 = scmp.ge.s32.totalorder %s30, 2
    $region12: #{tpu_custom_call.1} parent=1 // loop_header_branch
      %33 = sbr.rel (%p31) target = $region16
    $region13: #{tpu_custom_call.1} parent=1 // loop_body
      %s35 = smul.u32 %s30, 8
      %s36 = sadd.s32 %s28, %s35
      %s37 = sld [smem:[#allocation4 + %s36]]
      %s38 = scalar_lea.vmem [#allocation5], %s37
      %s39 = scalar_lea.vmem [#allocation8], %s35
      %p41 = scmp.lt.u32.totalorder 1, 8
      %p42 = pneg %p41
      // Predicated region
      $region17: #{tpu_custom_call.1} parent=13 // pred_check
        _
      $region18: #{tpu_custom_call.1} parent=13 // pred_check_branch
        %44 = sbr.rel (%p41) target = $region20
      $region19: #{tpu_custom_call.1} parent=13 // pred_region
        %s59 = sand.u32 1, 7
        %p60 = scmp.eq.s32.totalorder %s59, 0
        %p61 = pneg %p60
        // Predicated region
        $region32: #{tpu_custom_call.1} parent=19 // pred_check
          _
        $region33: #{tpu_custom_call.1} parent=19 // pred_check_branch
          %63 = sbr.rel (%p60) target = $region35
        $region34: #{tpu_custom_call.1} parent=19 // pred_region
          %s64 = sand.u32 1, 7
          %s65 = ssub.s32 1, %s64
          %s66 = scalar_lea.vmem %s38, %s65 [#allocation5]
          %s67 = ssub.s32 1, %s64
          %s68 = scalar_lea.vmem %s39, %s67 [#allocation8]
          %s69 = sshllo.u32 0, %s64
          loop: start=0, step=1, limit=1
          $region36: #{tpu_custom_call.1} parent=34 // loop_pre_header
            _
          $region37: #{tpu_custom_call.1} parent=34 // loop_header
            %s71 = sphi 0, %s75
            %p72 = scmp.ge.s32.totalorder %s71, 1
            %s76 = sphi %s66, %s66
            %s77 = sphi %s68, %s68
          $region38: #{tpu_custom_call.1} parent=34 // loop_header_branch
            %74 = sbr.rel (%p72) target = $region42
          $region39: #{tpu_custom_call.1} parent=34 // loop_body
            %v78 = vld [vmem:[%s76] sm:%s69]
            %79 = vst [vmem:[%s77] sm:%s69] %v78
          $region40: #{tpu_custom_call.1} parent=34 // loop_footer
            %s75 = sadd.s32 1, %s71
          $region41: #{tpu_custom_call.1} parent=34 // loop_footer_branch
            %70 = sbr.rel target = $region37
          $region42: #{tpu_custom_call.1} parent=34 // loop_exit
            _
        $region35: #{tpu_custom_call.1} parent=19 // pred_fallthru
          _
      $region20: #{tpu_custom_call.1} parent=13 // pred_fallthru
        _
      // Predicated region
      $region21: #{tpu_custom_call.1} parent=13 // pred_check
        %p45 = pneg %p41
      $region22: #{tpu_custom_call.1} parent=13 // pred_check_branch
        %47 = sbr.rel (%p45) target = $region24
      $region23: #{tpu_custom_call.1} parent=13 // pred_region
        %s48 = sshllo.u32 0, 1
        loop: start=0, step=1, limit=1
        $region25: #{tpu_custom_call.1} parent=23 // loop_pre_header
          _
        $region26: #{tpu_custom_call.1} parent=23 // loop_header
          %s50 = sphi 0, %s54
          %p51 = scmp.ge.s32.totalorder %s50, 1
          %s55 = sphi %s38, %s38
          %s56 = sphi %s39, %s39
        $region27: #{tpu_custom_call.1} parent=23 // loop_header_branch
          %53 = sbr.rel (%p51) target = $region31
        $region28: #{tpu_custom_call.1} parent=23 // loop_body
          %v57 = vld [vmem:[%s55] sm:%s48]
          %58 = vst [vmem:[%s56] sm:%s48] %v57
        $region29: #{tpu_custom_call.1} parent=23 // loop_footer
          %s54 = sadd.s32 1, %s50
        $region30: #{tpu_custom_call.1} parent=23 // loop_footer_branch
          %49 = sbr.rel target = $region26
        $region31: #{tpu_custom_call.1} parent=23 // loop_exit
          _
      $region24: #{tpu_custom_call.1} parent=13 // pred_fallthru
        _
      // Predicated region
      $region43: #{tpu_custom_call.1} parent=13 // pred_check
        _
      $region44: #{tpu_custom_call.1} parent=13 // pred_check_branch
        %82 = sbr.rel (0) target = $region46
      $region45: #{tpu_custom_call.1} parent=13 // pred_region
        %83 = vsyncadd [#allocation2], 16
      $region46: #{tpu_custom_call.1} parent=13 // pred_fallthru
        _
      %s84 = sadd.s32 %s35, 1
      %s85 = sadd.s32 %s28, %s84
      %s86 = sld [smem:[#allocation4 + %s85]]
      %s87 = scalar_lea.vmem [#allocation5], %s86
      %s88 = scalar_lea.vmem [#allocation8], %s84
      %p90 = scmp.lt.u32.totalorder 1, 8
      %p91 = pneg %p90
      // Predicated region
      $region47: #{tpu_custom_call.1} parent=13 // pred_check
        _
      $region48: #{tpu_custom_call.1} parent=13 // pred_check_branch
        %93 = sbr.rel (%p90) target = $region50
      $region49: #{tpu_custom_call.1} parent=13 // pred_region
        %s108 = sand.u32 1, 7
        %p109 = scmp.eq.s32.totalorder %s108, 0
        %p110 = pneg %p109
        // Predicated region
        $region62: #{tpu_custom_call.1} parent=49 // pred_check
          _
        $region63: #{tpu_custom_call.1} parent=49 // pred_check_branch
          %112 = sbr.rel (%p109) target = $region65
        $region64: #{tpu_custom_call.1} parent=49 // pred_region
          %s113 = sand.u32 1, 7
          %s114 = ssub.s32 1, %s113
          %s115 = scalar_lea.vmem %s87, %s114 [#allocation5]
          %s116 = ssub.s32 1, %s113
          %s117 = scalar_lea.vmem %s88, %s116 [#allocation8]
          %s118 = sshllo.u32 0, %s113
          loop: start=0, step=1, limit=1
          $region66: #{tpu_custom_call.1} parent=64 // loop_pre_header
            _
          $region67: #{tpu_custom_call.1} parent=64 // loop_header
            %s120 = sphi 0, %s124
            %p121 = scmp.ge.s32.totalorder %s120, 1
            %s125 = sphi %s115, %s115
            %s126 = sphi %s117, %s117
          $region68: #{tpu_custom_call.1} parent=64 // loop_header_branch
            %123 = sbr.rel (%p121) target = $region72
          $region69: #{tpu_custom_call.1} parent=64 // loop_body
            %v127 = vld [vmem:[%s125] sm:%s118]
            %128 = vst [vmem:[%s126] sm:%s118] %v127
          $region70: #{tpu_custom_call.1} parent=64 // loop_footer
            %s124 = sadd.s32 1, %s120
          $region71: #{tpu_custom_call.1} parent=64 // loop_footer_branch
            %119 = sbr.rel target = $region67
          $region72: #{tpu_custom_call.1} parent=64 // loop_exit
            _
        $region65: #{tpu_custom_call.1} parent=49 // pred_fallthru
          _
      $region50: #{tpu_custom_call.1} parent=13 // pred_fallthru
        _
      // Predicated region
      $region51: #{tpu_custom_call.1} parent=13 // pred_check
        %p94 = pneg %p90
      $region52: #{tpu_custom_call.1} parent=13 // pred_check_branch
        %96 = sbr.rel (%p94) target = $region54
      $region53: #{tpu_custom_call.1} parent=13 // pred_region
        %s97 = sshllo.u32 0, 1
        loop: start=0, step=1, limit=1
        $region55: #{tpu_custom_call.1} parent=53 // loop_pre_header
          _
        $region56: #{tpu_custom_call.1} parent=53 // loop_header
          %s99 = sphi 0, %s103
          %p100 = scmp.ge.s32.totalorder %s99, 1
          %s104 = sphi %s87, %s87
          %s105 = sphi %s88, %s88
        $region57: #{tpu_custom_call.1} parent=53 // loop_header_branch
          %102 = sbr.rel (%p100) target = $region61
        $region58: #{tpu_custom_call.1} parent=53 // loop_body
          %v106 = vld [vmem:[%s104] sm:%s97]
          %107 = vst [vmem:[%s105] sm:%s97] %v106
        $region59: #{tpu_custom_call.1} parent=53 // loop_footer
          %s103 = sadd.s32 1, %s99
        $region60: #{tpu_custom_call.1} parent=53 // loop_footer_branch
          %98 = sbr.rel target = $region56
        $region61: #{tpu_custom_call.1} parent=53 // loop_exit
          _
      $region54: #{tpu_custom_call.1} parent=13 // pred_fallthru
        _
      // Predicated region
      $region73: #{tpu_custom_call.1} parent=13 // pred_check
        _
      $region74: #{tpu_custom_call.1} parent=13 // pred_check_branch
        %131 = sbr.rel (0) target = $region76
      $region75: #{tpu_custom_call.1} parent=13 // pred_region
        %132 = vsyncadd [#allocation2], 16
      $region76: #{tpu_custom_call.1} parent=13 // pred_fallthru
        _
      %s133 = sadd.s32 %s35, 2
      %s134 = sadd.s32 %s28, %s133
      %s135 = sld [smem:[#allocation4 + %s134]]
      %s136 = scalar_lea.vmem [#allocation5], %s135
      %s137 = scalar_lea.vmem [#allocation8], %s133
      %p139 = scmp.lt.u32.totalorder 1, 8
      %p140 = pneg %p139
      // Predicated region
      $region77: #{tpu_custom_call.1} parent=13 // pred_check
        _
      $region78: #{tpu_custom_call.1} parent=13 // pred_check_branch
        %142 = sbr.rel (%p139) target = $region80
      $region79: #{tpu_custom_call.1} parent=13 // pred_region
        %s157 = sand.u32 1, 7
        %p158 = scmp.eq.s32.totalorder %s157, 0
        %p159 = pneg %p158
        // Predicated region
        $region92: #{tpu_custom_call.1} parent=79 // pred_check
          _
        $region93: #{tpu_custom_call.1} parent=79 // pred_check_branch
          %161 = sbr.rel (%p158) target = $region95
        $region94: #{tpu_custom_call.1} parent=79 // pred_region
          %s162 = sand.u32 1, 7
          %s163 = ssub.s32 1, %s162
          %s164 = scalar_lea.vmem %s136, %s163 [#allocation5]
          %s165 = ssub.s32 1, %s162
          %s166 = scalar_lea.vmem %s137, %s165 [#allocation8]
          %s167 = sshllo.u32 0, %s162
          loop: start=0, step=1, limit=1
          $region96: #{tpu_custom_call.1} parent=94 // loop_pre_header
            _
          $region97: #{tpu_custom_call.1} parent=94 // loop_header
            %s169 = sphi 0, %s173
            %p170 = scmp.ge.s32.totalorder %s169, 1
            %s174 = sphi %s164, %s164
            %s175 = sphi %s166, %s166
          $region98: #{tpu_custom_call.1} parent=94 // loop_header_branch
            %172 = sbr.rel (%p170) target = $region102
          $region99: #{tpu_custom_call.1} parent=94 // loop_body
            %v176 = vld [vmem:[%s174] sm:%s167]
            %177 = vst [vmem:[%s175] sm:%s167] %v176
          $region100: #{tpu_custom_call.1} parent=94 // loop_footer
            %s173 = sadd.s32 1, %s169
          $region101: #{tpu_custom_call.1} parent=94 // loop_footer_branch
            %168 = sbr.rel target = $region97
          $region102: #{tpu_custom_call.1} parent=94 // loop_exit
            _
        $region95: #{tpu_custom_call.1} parent=79 // pred_fallthru
          _
      $region80: #{tpu_custom_call.1} parent=13 // pred_fallthru
        _
      // Predicated region
      $region81: #{tpu_custom_call.1} parent=13 // pred_check
        %p143 = pneg %p139
      $region82: #{tpu_custom_call.1} parent=13 // pred_check_branch
        %145 = sbr.rel (%p143) target = $region84
      $region83: #{tpu_custom_call.1} parent=13 // pred_region
        %s146 = sshllo.u32 0, 1
        loop: start=0, step=1, limit=1
        $region85: #{tpu_custom_call.1} parent=83 // loop_pre_header
          _
        $region86: #{tpu_custom_call.1} parent=83 // loop_header
          %s148 = sphi 0, %s152
          %p149 = scmp.ge.s32.totalorder %s148, 1
          %s153 = sphi %s136, %s136
          %s154 = sphi %s137, %s137
        $region87: #{tpu_custom_call.1} parent=83 // loop_header_branch
          %151 = sbr.rel (%p149) target = $region91
        $region88: #{tpu_custom_call.1} parent=83 // loop_body
          %v155 = vld [vmem:[%s153] sm:%s146]
          %156 = vst [vmem:[%s154] sm:%s146] %v155
        $region89: #{tpu_custom_call.1} parent=83 // loop_footer
          %s152 = sadd.s32 1, %s148
        $region90: #{tpu_custom_call.1} parent=83 // loop_footer_branch
          %147 = sbr.rel target = $region86
        $region91: #{tpu_custom_call.1} parent=83 // loop_exit
          _
      $region84: #{tpu_custom_call.1} parent=13 // pred_fallthru
        _
      // Predicated region
      $region103: #{tpu_custom_call.1} parent=13 // pred_check
        _
      $region104: #{tpu_custom_call.1} parent=13 // pred_check_branch
        %180 = sbr.rel (0) target = $region106
      $region105: #{tpu_custom_call.1} parent=13 // pred_region
        %181 = vsyncadd [#allocation2], 16
      $region106: #{tpu_custom_call.1} parent=13 // pred_fallthru
        _
      %s182 = sadd.s32 %s35, 3
      %s183 = sadd.s32 %s28, %s182
      %s184 = sld [smem:[#allocation4 + %s183]]
      %s185 = scalar_lea.vmem [#allocation5], %s184
      %s186 = scalar_lea.vmem [#allocation8], %s182
      %p188 = scmp.lt.u32.totalorder 1, 8
      %p189 = pneg %p188
      // Predicated region
      $region107: #{tpu_custom_call.1} parent=13 // pred_check
        _
      $region108: #{tpu_custom_call.1} parent=13 // pred_check_branch
        %191 = sbr.rel (%p188) target = $region110
      $region109: #{tpu_custom_call.1} parent=13 // pred_region
        %s206 = sand.u32 1, 7
        %p207 = scmp.eq.s32.totalorder %s206, 0
        %p208 = pneg %p207
        // Predicated region
        $region122: #{tpu_custom_call.1} parent=109 // pred_check
          _
        $region123: #{tpu_custom_call.1} parent=109 // pred_check_branch
          %210 = sbr.rel (%p207) target = $region125
        $region124: #{tpu_custom_call.1} parent=109 // pred_region
          %s211 = sand.u32 1, 7
          %s212 = ssub.s32 1, %s211
          %s213 = scalar_lea.vmem %s185, %s212 [#allocation5]
          %s214 = ssub.s32 1, %s211
          %s215 = scalar_lea.vmem %s186, %s214 [#allocation8]
          %s216 = sshllo.u32 0, %s211
          loop: start=0, step=1, limit=1
          $region126: #{tpu_custom_call.1} parent=124 // loop_pre_header
            _
          $region127: #{tpu_custom_call.1} parent=124 // loop_header
            %s218 = sphi 0, %s222
            %p219 = scmp.ge.s32.totalorder %s218, 1
            %s223 = sphi %s213, %s213
            %s224 = sphi %s215, %s215
          $region128: #{tpu_custom_call.1} parent=124 // loop_header_branch
            %221 = sbr.rel (%p219) target = $region132
          $region129: #{tpu_custom_call.1} parent=124 // loop_body
            %v225 = vld [vmem:[%s223] sm:%s216]
            %226 = vst [vmem:[%s224] sm:%s216] %v225
          $region130: #{tpu_custom_call.1} parent=124 // loop_footer
            %s222 = sadd.s32 1, %s218
          $region131: #{tpu_custom_call.1} parent=124 // loop_footer_branch
            %217 = sbr.rel target = $region127
          $region132: #{tpu_custom_call.1} parent=124 // loop_exit
            _
        $region125: #{tpu_custom_call.1} parent=109 // pred_fallthru
          _
      $region110: #{tpu_custom_call.1} parent=13 // pred_fallthru
        _
      // Predicated region
      $region111: #{tpu_custom_call.1} parent=13 // pred_check
        %p192 = pneg %p188
      $region112: #{tpu_custom_call.1} parent=13 // pred_check_branch
        %194 = sbr.rel (%p192) target = $region114
      $region113: #{tpu_custom_call.1} parent=13 // pred_region
        %s195 = sshllo.u32 0, 1
        loop: start=0, step=1, limit=1
        $region115: #{tpu_custom_call.1} parent=113 // loop_pre_header
          _
        $region116: #{tpu_custom_call.1} parent=113 // loop_header
          %s197 = sphi 0, %s201
          %p198 = scmp.ge.s32.totalorder %s197, 1
          %s202 = sphi %s185, %s185
          %s203 = sphi %s186, %s186
        $region117: #{tpu_custom_call.1} parent=113 // loop_header_branch
          %200 = sbr.rel (%p198) target = $region121
        $region118: #{tpu_custom_call.1} parent=113 // loop_body
          %v204 = vld [vmem:[%s202] sm:%s195]
          %205 = vst [vmem:[%s203] sm:%s195] %v204
        $region119: #{tpu_custom_call.1} parent=113 // loop_footer
          %s201 = sadd.s32 1, %s197
        $region120: #{tpu_custom_call.1} parent=113 // loop_footer_branch
          %196 = sbr.rel target = $region116
        $region121: #{tpu_custom_call.1} parent=113 // loop_exit
          _
      $region114: #{tpu_custom_call.1} parent=13 // pred_fallthru
        _
      // Predicated region
      $region133: #{tpu_custom_call.1} parent=13 // pred_check
        _
      $region134: #{tpu_custom_call.1} parent=13 // pred_check_branch
        %229 = sbr.rel (0) target = $region136
      $region135: #{tpu_custom_call.1} parent=13 // pred_region
        %230 = vsyncadd [#allocation2], 16
      $region136: #{tpu_custom_call.1} parent=13 // pred_fallthru
        _
      %s231 = sadd.s32 %s35, 4
      %s232 = sadd.s32 %s28, %s231
      %s233 = sld [smem:[#allocation4 + %s232]]
      %s234 = scalar_lea.vmem [#allocation5], %s233
      %s235 = scalar_lea.vmem [#allocation8], %s231
      %p237 = scmp.lt.u32.totalorder 1, 8
      %p238 = pneg %p237
      // Predicated region
      $region137: #{tpu_custom_call.1} parent=13 // pred_check
        _
      $region138: #{tpu_custom_call.1} parent=13 // pred_check_branch
        %240 = sbr.rel (%p237) target = $region140
      $region139: #{tpu_custom_call.1} parent=13 // pred_region
        %s255 = sand.u32 1, 7
        %p256 = scmp.eq.s32.totalorder %s255, 0
        %p257 = pneg %p256
        // Predicated region
        $region152: #{tpu_custom_call.1} parent=139 // pred_check
          _
        $region153: #{tpu_custom_call.1} parent=139 // pred_check_branch
          %259 = sbr.rel (%p256) target = $region155
        $region154: #{tpu_custom_call.1} parent=139 // pred_region
          %s260 = sand.u32 1, 7
          %s261 = ssub.s32 1, %s260
          %s262 = scalar_lea.vmem %s234, %s261 [#allocation5]
          %s263 = ssub.s32 1, %s260
          %s264 = scalar_lea.vmem %s235, %s263 [#allocation8]
          %s265 = sshllo.u32 0, %s260
          loop: start=0, step=1, limit=1
          $region156: #{tpu_custom_call.1} parent=154 // loop_pre_header
            _
          $region157: #{tpu_custom_call.1} parent=154 // loop_header
            %s267 = sphi 0, %s271
            %p268 = scmp.ge.s32.totalorder %s267, 1
            %s272 = sphi %s262, %s262
            %s273 = sphi %s264, %s264
          $region158: #{tpu_custom_call.1} parent=154 // loop_header_branch
            %270 = sbr.rel (%p268) target = $region162
          $region159: #{tpu_custom_call.1} parent=154 // loop_body
            %v274 = vld [vmem:[%s272] sm:%s265]
            %275 = vst [vmem:[%s273] sm:%s265] %v274
          $region160: #{tpu_custom_call.1} parent=154 // loop_footer
            %s271 = sadd.s32 1, %s267
          $region161: #{tpu_custom_call.1} parent=154 // loop_footer_branch
            %266 = sbr.rel target = $region157
          $region162: #{tpu_custom_call.1} parent=154 // loop_exit
            _
        $region155: #{tpu_custom_call.1} parent=139 // pred_fallthru
          _
      $region140: #{tpu_custom_call.1} parent=13 // pred_fallthru
        _
      // Predicated region
      $region141: #{tpu_custom_call.1} parent=13 // pred_check
        %p241 = pneg %p237
      $region142: #{tpu_custom_call.1} parent=13 // pred_check_branch
        %243 = sbr.rel (%p241) target = $region144
      $region143: #{tpu_custom_call.1} parent=13 // pred_region
        %s244 = sshllo.u32 0, 1
        loop: start=0, step=1, limit=1
        $region145: #{tpu_custom_call.1} parent=143 // loop_pre_header
          _
        $region146: #{tpu_custom_call.1} parent=143 // loop_header
          %s246 = sphi 0, %s250
          %p247 = scmp.ge.s32.totalorder %s246, 1
          %s251 = sphi %s234, %s234
          %s252 = sphi %s235, %s235
        $region147: #{tpu_custom_call.1} parent=143 // loop_header_branch
          %249 = sbr.rel (%p247) target = $region151
        $region148: #{tpu_custom_call.1} parent=143 // loop_body
          %v253 = vld [vmem:[%s251] sm:%s244]
          %254 = vst [vmem:[%s252] sm:%s244] %v253
        $region149: #{tpu_custom_call.1} parent=143 // loop_footer
          %s250 = sadd.s32 1, %s246
        $region150: #{tpu_custom_call.1} parent=143 // loop_footer_branch
          %245 = sbr.rel target = $region146
        $region151: #{tpu_custom_call.1} parent=143 // loop_exit
          _
      $region144: #{tpu_custom_call.1} parent=13 // pred_fallthru
        _
      // Predicated region
      $region163: #{tpu_custom_call.1} parent=13 // pred_check
        _
      $region164: #{tpu_custom_call.1} parent=13 // pred_check_branch
        %278 = sbr.rel (0) target = $region166
      $region165: #{tpu_custom_call.1} parent=13 // pred_region
        %279 = vsyncadd [#allocation2], 16
      $region166: #{tpu_custom_call.1} parent=13 // pred_fallthru
        _
      %s280 = sadd.s32 %s35, 5
      %s281 = sadd.s32 %s28, %s280
      %s282 = sld [smem:[#allocation4 + %s281]]
      %s283 = scalar_lea.vmem [#allocation5], %s282
      %s284 = scalar_lea.vmem [#allocation8], %s280
      %p286 = scmp.lt.u32.totalorder 1, 8
      %p287 = pneg %p286
      // Predicated region
      $region167: #{tpu_custom_call.1} parent=13 // pred_check
        _
      $region168: #{tpu_custom_call.1} parent=13 // pred_check_branch
        %289 = sbr.rel (%p286) target = $region170
      $region169: #{tpu_custom_call.1} parent=13 // pred_region
        %s304 = sand.u32 1, 7
        %p305 = scmp.eq.s32.totalorder %s304, 0
        %p306 = pneg %p305
        // Predicated region
        $region182: #{tpu_custom_call.1} parent=169 // pred_check
          _
        $region183: #{tpu_custom_call.1} parent=169 // pred_check_branch
          %308 = sbr.rel (%p305) target = $region185
        $region184: #{tpu_custom_call.1} parent=169 // pred_region
          %s309 = sand.u32 1, 7
          %s310 = ssub.s32 1, %s309
          %s311 = scalar_lea.vmem %s283, %s310 [#allocation5]
          %s312 = ssub.s32 1, %s309
          %s313 = scalar_lea.vmem %s284, %s312 [#allocation8]
          %s314 = sshllo.u32 0, %s309
          loop: start=0, step=1, limit=1
          $region186: #{tpu_custom_call.1} parent=184 // loop_pre_header
            _
          $region187: #{tpu_custom_call.1} parent=184 // loop_header
            %s316 = sphi 0, %s320
            %p317 = scmp.ge.s32.totalorder %s316, 1
            %s321 = sphi %s311, %s311
            %s322 = sphi %s313, %s313
          $region188: #{tpu_custom_call.1} parent=184 // loop_header_branch
            %319 = sbr.rel (%p317) target = $region192
          $region189: #{tpu_custom_call.1} parent=184 // loop_body
            %v323 = vld [vmem:[%s321] sm:%s314]
            %324 = vst [vmem:[%s322] sm:%s314] %v323
          $region190: #{tpu_custom_call.1} parent=184 // loop_footer
            %s320 = sadd.s32 1, %s316
          $region191: #{tpu_custom_call.1} parent=184 // loop_footer_branch
            %315 = sbr.rel target = $region187
          $region192: #{tpu_custom_call.1} parent=184 // loop_exit
            _
        $region185: #{tpu_custom_call.1} parent=169 // pred_fallthru
          _
      $region170: #{tpu_custom_call.1} parent=13 // pred_fallthru
        _
      // Predicated region
      $region171: #{tpu_custom_call.1} parent=13 // pred_check
        %p290 = pneg %p286
      $region172: #{tpu_custom_call.1} parent=13 // pred_check_branch
        %292 = sbr.rel (%p290) target = $region174
      $region173: #{tpu_custom_call.1} parent=13 // pred_region
        %s293 = sshllo.u32 0, 1
        loop: start=0, step=1, limit=1
        $region175: #{tpu_custom_call.1} parent=173 // loop_pre_header
          _
        $region176: #{tpu_custom_call.1} parent=173 // loop_header
          %s295 = sphi 0, %s299
          %p296 = scmp.ge.s32.totalorder %s295, 1
          %s300 = sphi %s283, %s283
          %s301 = sphi %s284, %s284
        $region177: #{tpu_custom_call.1} parent=173 // loop_header_branch
          %298 = sbr.rel (%p296) target = $region181
        $region178: #{tpu_custom_call.1} parent=173 // loop_body
          %v302 = vld [vmem:[%s300] sm:%s293]
          %303 = vst [vmem:[%s301] sm:%s293] %v302
        $region179: #{tpu_custom_call.1} parent=173 // loop_footer
          %s299 = sadd.s32 1, %s295
        $region180: #{tpu_custom_call.1} parent=173 // loop_footer_branch
          %294 = sbr.rel target = $region176
        $region181: #{tpu_custom_call.1} parent=173 // loop_exit
          _
      $region174: #{tpu_custom_call.1} parent=13 // pred_fallthru
        _
      // Predicated region
      $region193: #{tpu_custom_call.1} parent=13 // pred_check
        _
      $region194: #{tpu_custom_call.1} parent=13 // pred_check_branch
        %327 = sbr.rel (0) target = $region196
      $region195: #{tpu_custom_call.1} parent=13 // pred_region
        %328 = vsyncadd [#allocation2], 16
      $region196: #{tpu_custom_call.1} parent=13 // pred_fallthru
        _
      %s329 = sadd.s32 %s35, 6
      %s330 = sadd.s32 %s28, %s329
      %s331 = sld [smem:[#allocation4 + %s330]]
      %s332 = scalar_lea.vmem [#allocation5], %s331
      %s333 = scalar_lea.vmem [#allocation8], %s329
      %p335 = scmp.lt.u32.totalorder 1, 8
      %p336 = pneg %p335
      // Predicated region
      $region197: #{tpu_custom_call.1} parent=13 // pred_check
        _
      $region198: #{tpu_custom_call.1} parent=13 // pred_check_branch
        %338 = sbr.rel (%p335) target = $region200
      $region199: #{tpu_custom_call.1} parent=13 // pred_region
        %s353 = sand.u32 1, 7
        %p354 = scmp.eq.s32.totalorder %s353, 0
        %p355 = pneg %p354
        // Predicated region
        $region212: #{tpu_custom_call.1} parent=199 // pred_check
          _
        $region213: #{tpu_custom_call.1} parent=199 // pred_check_branch
          %357 = sbr.rel (%p354) target = $region215
        $region214: #{tpu_custom_call.1} parent=199 // pred_region
          %s358 = sand.u32 1, 7
          %s359 = ssub.s32 1, %s358
          %s360 = scalar_lea.vmem %s332, %s359 [#allocation5]
          %s361 = ssub.s32 1, %s358
          %s362 = scalar_lea.vmem %s333, %s361 [#allocation8]
          %s363 = sshllo.u32 0, %s358
          loop: start=0, step=1, limit=1
          $region216: #{tpu_custom_call.1} parent=214 // loop_pre_header
            _
          $region217: #{tpu_custom_call.1} parent=214 // loop_header
            %s365 = sphi 0, %s369
            %p366 = scmp.ge.s32.totalorder %s365, 1
            %s370 = sphi %s360, %s360
            %s371 = sphi %s362, %s362
          $region218: #{tpu_custom_call.1} parent=214 // loop_header_branch
            %368 = sbr.rel (%p366) target = $region222
          $region219: #{tpu_custom_call.1} parent=214 // loop_body
            %v372 = vld [vmem:[%s370] sm:%s363]
            %373 = vst [vmem:[%s371] sm:%s363] %v372
          $region220: #{tpu_custom_call.1} parent=214 // loop_footer
            %s369 = sadd.s32 1, %s365
          $region221: #{tpu_custom_call.1} parent=214 // loop_footer_branch
            %364 = sbr.rel target = $region217
          $region222: #{tpu_custom_call.1} parent=214 // loop_exit
            _
        $region215: #{tpu_custom_call.1} parent=199 // pred_fallthru
          _
      $region200: #{tpu_custom_call.1} parent=13 // pred_fallthru
        _
      // Predicated region
      $region201: #{tpu_custom_call.1} parent=13 // pred_check
        %p339 = pneg %p335
      $region202: #{tpu_custom_call.1} parent=13 // pred_check_branch
        %341 = sbr.rel (%p339) target = $region204
      $region203: #{tpu_custom_call.1} parent=13 // pred_region
        %s342 = sshllo.u32 0, 1
        loop: start=0, step=1, limit=1
        $region205: #{tpu_custom_call.1} parent=203 // loop_pre_header
          _
        $region206: #{tpu_custom_call.1} parent=203 // loop_header
          %s344 = sphi 0, %s348
          %p345 = scmp.ge.s32.totalorder %s344, 1
          %s349 = sphi %s332, %s332
          %s350 = sphi %s333, %s333
        $region207: #{tpu_custom_call.1} parent=203 // loop_header_branch
          %347 = sbr.rel (%p345) target = $region211
        $region208: #{tpu_custom_call.1} parent=203 // loop_body
          %v351 = vld [vmem:[%s349] sm:%s342]
          %352 = vst [vmem:[%s350] sm:%s342] %v351
        $region209: #{tpu_custom_call.1} parent=203 // loop_footer
          %s348 = sadd.s32 1, %s344
        $region210: #{tpu_custom_call.1} parent=203 // loop_footer_branch
          %343 = sbr.rel target = $region206
        $region211: #{tpu_custom_call.1} parent=203 // loop_exit
          _
      $region204: #{tpu_custom_call.1} parent=13 // pred_fallthru
        _
      // Predicated region
      $region223: #{tpu_custom_call.1} parent=13 // pred_check
        _
      $region224: #{tpu_custom_call.1} parent=13 // pred_check_branch
        %376 = sbr.rel (0) target = $region226
      $region225: #{tpu_custom_call.1} parent=13 // pred_region
        %377 = vsyncadd [#allocation2], 16
      $region226: #{tpu_custom_call.1} parent=13 // pred_fallthru
        _
      %s378 = sadd.s32 %s35, 7
      %s379 = sadd.s32 %s28, %s378
      %s380 = sld [smem:[#allocation4 + %s379]]
      %s381 = scalar_lea.vmem [#allocation5], %s380
      %s382 = scalar_lea.vmem [#allocation8], %s378
      %p384 = scmp.lt.u32.totalorder 1, 8
      %p385 = pneg %p384
      // Predicated region
      $region227: #{tpu_custom_call.1} parent=13 // pred_check
        _
      $region228: #{tpu_custom_call.1} parent=13 // pred_check_branch
        %387 = sbr.rel (%p384) target = $region230
      $region229: #{tpu_custom_call.1} parent=13 // pred_region
        %s402 = sand.u32 1, 7
        %p403 = scmp.eq.s32.totalorder %s402, 0
        %p404 = pneg %p403
        // Predicated region
        $region242: #{tpu_custom_call.1} parent=229 // pred_check
          _
        $region243: #{tpu_custom_call.1} parent=229 // pred_check_branch
          %406 = sbr.rel (%p403) target = $region245
        $region244: #{tpu_custom_call.1} parent=229 // pred_region
          %s407 = sand.u32 1, 7
          %s408 = ssub.s32 1, %s407
          %s409 = scalar_lea.vmem %s381, %s408 [#allocation5]
          %s410 = ssub.s32 1, %s407
          %s411 = scalar_lea.vmem %s382, %s410 [#allocation8]
          %s412 = sshllo.u32 0, %s407
          loop: start=0, step=1, limit=1
          $region246: #{tpu_custom_call.1} parent=244 // loop_pre_header
            _
          $region247: #{tpu_custom_call.1} parent=244 // loop_header
            %s414 = sphi 0, %s418
            %p415 = scmp.ge.s32.totalorder %s414, 1
            %s419 = sphi %s409, %s409
            %s420 = sphi %s411, %s411
          $region248: #{tpu_custom_call.1} parent=244 // loop_header_branch
            %417 = sbr.rel (%p415) target = $region252
          $region249: #{tpu_custom_call.1} parent=244 // loop_body
            %v421 = vld [vmem:[%s419] sm:%s412]
            %422 = vst [vmem:[%s420] sm:%s412] %v421
          $region250: #{tpu_custom_call.1} parent=244 // loop_footer
            %s418 = sadd.s32 1, %s414
          $region251: #{tpu_custom_call.1} parent=244 // loop_footer_branch
            %413 = sbr.rel target = $region247
          $region252: #{tpu_custom_call.1} parent=244 // loop_exit
            _
        $region245: #{tpu_custom_call.1} parent=229 // pred_fallthru
          _
      $region230: #{tpu_custom_call.1} parent=13 // pred_fallthru
        _
      // Predicated region
      $region231: #{tpu_custom_call.1} parent=13 // pred_check
        %p388 = pneg %p384
      $region232: #{tpu_custom_call.1} parent=13 // pred_check_branch
        %390 = sbr.rel (%p388) target = $region234
      $region233: #{tpu_custom_call.1} parent=13 // pred_region
        %s391 = sshllo.u32 0, 1
        loop: start=0, step=1, limit=1
        $region235: #{tpu_custom_call.1} parent=233 // loop_pre_header
          _
        $region236: #{tpu_custom_call.1} parent=233 // loop_header
          %s393 = sphi 0, %s397
          %p394 = scmp.ge.s32.totalorder %s393, 1
          %s398 = sphi %s381, %s381
          %s399 = sphi %s382, %s382
        $region237: #{tpu_custom_call.1} parent=233 // loop_header_branch
          %396 = sbr.rel (%p394) target = $region241
        $region238: #{tpu_custom_call.1} parent=233 // loop_body
          %v400 = vld [vmem:[%s398] sm:%s391]
          %401 = vst [vmem:[%s399] sm:%s391] %v400
        $region239: #{tpu_custom_call.1} parent=233 // loop_footer
          %s397 = sadd.s32 1, %s393
        $region240: #{tpu_custom_call.1} parent=233 // loop_footer_branch
          %392 = sbr.rel target = $region236
        $region241: #{tpu_custom_call.1} parent=233 // loop_exit
          _
      $region234: #{tpu_custom_call.1} parent=13 // pred_fallthru
        _
      // Predicated region
      $region253: #{tpu_custom_call.1} parent=13 // pred_check
        _
      $region254: #{tpu_custom_call.1} parent=13 // pred_check_branch
        %425 = sbr.rel (0) target = $region256
      $region255: #{tpu_custom_call.1} parent=13 // pred_region
        %426 = vsyncadd [#allocation2], 16
      $region256: #{tpu_custom_call.1} parent=13 // pred_fallthru
        _
    $region14: #{tpu_custom_call.1} parent=1 // loop_footer
      %s34 = sadd.s32 1, %s30
    $region15: #{tpu_custom_call.1} parent=1 // loop_footer_branch
      %29 = sbr.rel target = $region11
    $region16: #{tpu_custom_call.1} parent=1 // loop_exit
      _
    loop: start=0, step=1, limit=2
    $region257: #{tpu_custom_call.1} parent=1 // loop_pre_header
      _
    $region258: #{tpu_custom_call.1} parent=1 // loop_header
      %s428 = sphi 0, %s432
      %p429 = scmp.ge.s32.totalorder %s428, 2
    $region259: #{tpu_custom_call.1} parent=1 // loop_header_branch
      %431 = sbr.rel (%p429) target = $region263
    $region260: #{tpu_custom_call.1} parent=1 // loop_body
      %s433 = smul.u32 1, 1
      %s434 = sshll.u32 %s433, 4
      %435 = dma.done [#allocation2], %s434
      %s436 = sshll.u32 %s433, 4
      %437 = dma.done [#allocation2], %s436
      %s438 = sshll.u32 %s433, 4
      %439 = dma.done [#allocation2], %s438
      %s440 = sshll.u32 %s433, 4
      %441 = dma.done [#allocation2], %s440
      %s442 = sshll.u32 %s433, 4
      %443 = dma.done [#allocation2], %s442
      %s444 = sshll.u32 %s433, 4
      %445 = dma.done [#allocation2], %s444
      %s446 = sshll.u32 %s433, 4
      %447 = dma.done [#allocation2], %s446
      %s448 = sshll.u32 %s433, 4
      %449 = dma.done [#allocation2], %s448
    $region261: #{tpu_custom_call.1} parent=1 // loop_footer
      %s432 = sadd.s32 1, %s428
    $region262: #{tpu_custom_call.1} parent=1 // loop_footer_branch
      %427 = sbr.rel target = $region258
    $region263: #{tpu_custom_call.1} parent=1 // loop_exit
      _
    // Predicated region
    $region264: #{tpu_custom_call.1} parent=1 // pred_check
      _
    $region265: #{tpu_custom_call.1} parent=1 // pred_check_branch
      %451 = sbr.rel (0) target = $region267
    $region266: #{tpu_custom_call.1} parent=1 // pred_region
      %s453 = ssub.s32 256, 256
      %454 = vsyncadd [#allocation7], %s453
      %s455 = sshll.u32 [#allocation8], 4
      %s456 = int_to_ptr.vmem [resolvable:$true] %s455
      %461 = dma.vmem_to_hbm [thread:$0]  %s456, 256, %s2, [#allocation7], 128, 128, 8
    $region267: #{tpu_custom_call.1} parent=1 // pred_fallthru
      _
    // Predicated region
    $region268: #{tpu_custom_call.1} parent=1 // pred_check
      _
    $region269: #{tpu_custom_call.1} parent=1 // pred_check_branch
      %463 = sbr.rel (0) target = $region271
    $region270: #{tpu_custom_call.1} parent=1 // pred_region
      %464 = dma.done [#allocation7], 256
    $region271: #{tpu_custom_call.1} parent=1 // pred_fallthru
      _
    %465 = vsyncpa [#allocation6], 1
    %466 = vsyncpa [#allocation7], 1
  %467 = vsyncmov [#allocation2]
  %s468 = vpop.sfrf %467
  %p469 = scmp.eq.s32.totalorder %s468, 0
  %p470 = pneg %p469
  %472 = shalt.err (%p470)

</llo_original>
